<compile_context>
chip_gen: v7x
topology: tpu7x:2x2x1
jax: 0.10.0
libtpu: 0.0.40
codegen_flags: <defaults>
</compile_context>

<pallas_src>
import jax
import jax.numpy as jnp
from jax.experimental import pallas as pl
from jax.experimental.pallas import tpu as pltpu


def _regloss_kernel(pred_ref, tgt_ref, mask_ref, loss_ref, msum_ref):
    # pred_ref : VMEM (BT, C, M)  gathered features (native dtype)
    # tgt_ref  : VMEM (BT, C, M)  regression targets (native dtype)
    # mask_ref : VMEM (BT, 1, M)  float32 object mask
    # loss_ref : VMEM (1, 1, C)   per-step partial loss sum over (batch, objects)
    # msum_ref : VMEM (1, 1, 1)   per-step partial mask sum
    pred = pred_ref[...].astype(jnp.float32)        # cast tiny tile in-kernel
    tgt = tgt_ref[...].astype(jnp.float32)
    m = mask_ref[...].astype(jnp.float32)           # (BT, 1, M), broadcasts over C

    l = jnp.abs(pred * m - tgt * m)                 # (BT, C, M), M on lanes
    l_cm = jnp.sum(l, axis=0)                       # (C, M)  reduce over batch tile
    loss_ref[...] = jnp.sum(l_cm, axis=1).reshape(1, 1, -1)   # (1, 1, C)
    msum_ref[...] = jnp.sum(m).reshape(1, 1, 1)


def reg_loss(output, mask, ind, target, *, batch_tile=8):
    """output (B,C,H,W); mask (B,M); ind (B,M) int; target (B,M,C) -> (C,) f32."""
    B, C, H, W = output.shape
    M = ind.shape[1]
    HW = H * W

    # ---- tiny XLA-side glue (no full-map transpose / upcast) ----------------
    feat = output.reshape(B, C, HW)                        # free view of NCHW
    idx = jnp.clip(ind.astype(jnp.int32), 0, HW - 1)       # bounds-safe gather
    gather_idx = jnp.broadcast_to(idx[:, None, :], (B, C, M))
    pred = jnp.take_along_axis(feat, gather_idx, axis=2)   # (B, C, M), native dtype
    tgt = jnp.transpose(target, (0, 2, 1))                 # (B, C, M), tiny
    msk = mask.astype(jnp.float32)[:, None, :]             # (B, 1, M)

    # ---- pad batch to a multiple of the batch tile (padded rows: mask=0) ----
    BT = min(B, batch_tile)
    NB = -(-B // BT)
    B_pad = NB * BT
    if B_pad != B:
        pad = ((0, B_pad - B), (0, 0), (0, 0))
        pred = jnp.pad(pred, pad)
        tgt = jnp.pad(tgt, pad)
        msk = jnp.pad(msk, pad)

    loss_part, msum_part = pl.pallas_call(
        _regloss_kernel,
        out_shape=(
            jax.ShapeDtypeStruct((NB, 1, C), jnp.float32),
            jax.ShapeDtypeStruct((NB, 1, 1), jnp.float32),
        ),
        grid=(NB,),
        in_specs=[
            pl.BlockSpec((BT, C, M), lambda i: (i, 0, 0)),   # pred tile
            pl.BlockSpec((BT, C, M), lambda i: (i, 0, 0)),   # target tile
            pl.BlockSpec((BT, 1, M), lambda i: (i, 0, 0)),   # mask tile (VMEM)
        ],
        out_specs=(
            pl.BlockSpec((1, 1, C), lambda i: (i, 0, 0)),    # partial loss sum
            pl.BlockSpec((1, 1, 1), lambda i: (i, 0, 0)),    # partial mask sum
        ),
        compiler_params=pltpu.CompilerParams(
            dimension_semantics=("parallel",)),
    )(pred, tgt, msk)

    # tiny epilogue: combine partials, divide once by the global mask sum
    # (division by a constant is linear, so sum-then-divide matches reference).
    total_msum = jnp.sum(msum_part)
    return jnp.sum(loss_part, axis=(0, 1)) / (total_msum + jnp.float32(1e-4))


def reg_loss_ref(output, mask, ind, target):
    """Pure-JAX reference mirroring the PyTorch code."""
    B, C, H, W = output.shape
    feat = jnp.transpose(output, (0, 2, 3, 1)).reshape(B, H * W, C)
    pred = jnp.take_along_axis(feat, ind[:, :, None].astype(jnp.int32), axis=1)
    m = mask.astype(jnp.float32)[:, :, None]
    loss = jnp.abs(pred * m - target * m)
    loss = loss / (m.sum() + 0.0001)
    return loss.sum(axis=(0, 1))  # == loss.transpose(2,0).sum(2).sum(1)


if __name__ == "__main__":
    key = jax.random.PRNGKey(0)
    k1, k2, k3, k4 = jax.random.split(key, 4)

    B, C, H, W, M = 2, 4, 16, 16, 8
    output = jax.random.normal(k1, (B, C, H, W), dtype=jnp.float32)
    target = jax.random.normal(k2, (B, M, C), dtype=jnp.float32)
    ind = jax.random.randint(k3, (B, M), 0, H * W, dtype=jnp.int32)
    mask = (jax.random.uniform(k4, (B, M)) > 0.3).astype(jnp.float32)

    got = jax.block_until_ready(reg_loss(output, mask, ind, target))
    want = jax.block_until_ready(reg_loss_ref(output, mask, ind, target))

    assert got.shape == (C,)
    assert jnp.allclose(got, want, atol=1e-5, rtol=1e-5), (got, want)
    print("KERNEL_OK")
</pallas_src>

<mosaic_0001>
module attributes {stable_mosaic.version = 11 : i64} {
  func.func @_regloss_kernel(%arg0: i32, %arg1: memref<2x4x8xf32, #tpu.memory_space<vmem>>, %arg2: memref<2x4x8xf32, #tpu.memory_space<vmem>>, %arg3: memref<2x1x8xf32, #tpu.memory_space<vmem>>, %arg4: memref<1x1x4xf32, #tpu.memory_space<vmem>>, %arg5: memref<1x1x1xf32, #tpu.memory_space<vmem>>) attributes {dimension_semantics = [#tpu.dimension_semantics<parallel>], iteration_bounds = array<i64: 1>, scalar_prefetch = 0 : i64, scratch_operands = 0 : i64, tpu.core_type = #tpu.core_type<tc>, window_params = [{transform_indices = @transform_0, window_bounds = array<i64: 2, 4, 8>}, {transform_indices = @transform_1, window_bounds = array<i64: 2, 4, 8>}, {transform_indices = @transform_2, window_bounds = array<i64: 2, 1, 8>}, {transform_indices = @transform_3, window_bounds = array<i64: 1, 1, 4>}, {transform_indices = @transform_4, window_bounds = array<i64: 1, 1, 1>}]} {
    %c0 = arith.constant 0 : index
    %c0_0 = arith.constant 0 : index
    %c0_1 = arith.constant 0 : index
    %0 = vector.load %arg1[%c0, %c0_0, %c0_1] : memref<2x4x8xf32, #tpu.memory_space<vmem>>, vector<2x4x8xf32>
    %c0_2 = arith.constant 0 : index
    %c0_3 = arith.constant 0 : index
    %c0_4 = arith.constant 0 : index
    %1 = vector.load %arg2[%c0_2, %c0_3, %c0_4] : memref<2x4x8xf32, #tpu.memory_space<vmem>>, vector<2x4x8xf32>
    %c0_5 = arith.constant 0 : index
    %c0_6 = arith.constant 0 : index
    %c0_7 = arith.constant 0 : index
    %2 = vector.load %arg3[%c0_5, %c0_6, %c0_7] : memref<2x1x8xf32, #tpu.memory_space<vmem>>, vector<2x1x8xf32>
    %3 = vector.broadcast %2 : vector<2x1x8xf32> to vector<2x4x8xf32>
    %4 = arith.mulf %0, %3 : vector<2x4x8xf32>
    %5 = vector.broadcast %2 : vector<2x1x8xf32> to vector<2x4x8xf32>
    %6 = arith.mulf %1, %5 : vector<2x4x8xf32>
    %7 = arith.subf %4, %6 : vector<2x4x8xf32>
    %8 = math.absf %7 : vector<2x4x8xf32>
    %cst = arith.constant dense<0.000000e+00> : vector<4x8xf32>
    %9 = vector.multi_reduction <add>, %8, %cst [0] : vector<2x4x8xf32> to vector<4x8xf32>
    %cst_8 = arith.constant dense<0.000000e+00> : vector<4xf32>
    %10 = vector.multi_reduction <add>, %9, %cst_8 [1] : vector<4x8xf32> to vector<4xf32>
    %11 = vector.shape_cast %10 : vector<4xf32> to vector<1x1x4xf32>
    %c0_9 = arith.constant 0 : index
    %c0_10 = arith.constant 0 : index
    %c0_11 = arith.constant 0 : index
    %12 = vector.load %arg4[%c0_9, %c0_10, %c0_11] : memref<1x1x4xf32, #tpu.memory_space<vmem>>, vector<1x1x4xf32>
    tpu.vector_store %arg4[%c0_9, %c0_10, %c0_11], %11 {strides = array<i32>} : memref<1x1x4xf32, #tpu.memory_space<vmem>>, vector<1x1x4xf32>,
    %13 = vector.shape_cast %2 : vector<2x1x8xf32> to vector<1x2x1x8xf32>
    %cst_12 = arith.constant dense<0.000000e+00> : vector<1xf32>
    %14 = vector.multi_reduction <add>, %13, %cst_12 [1, 2, 3] : vector<1x2x1x8xf32> to vector<1xf32>
    %15 = vector.shape_cast %14 : vector<1xf32> to vector<1x1x1x1xf32>
    %16 = vector.extract %15[0, 0, 0, 0] : f32 from vector<1x1x1x1xf32>
    %17 = vector.broadcast %16 : f32 to vector<1x1x1xf32>
    %c0_13 = arith.constant 0 : index
    %c0_14 = arith.constant 0 : index
    %c0_15 = arith.constant 0 : index
    %18 = vector.load %arg5[%c0_13, %c0_14, %c0_15] : memref<1x1x1xf32, #tpu.memory_space<vmem>>, vector<1x1x1xf32>
    tpu.vector_store %arg5[%c0_13, %c0_14, %c0_15], %17 {strides = array<i32>} : memref<1x1x1xf32, #tpu.memory_space<vmem>>, vector<1x1x1xf32>,
    return
  }
  func.func @transform_0(%arg0: i32) -> (i32, i32, i32) {
    %c0_i32 = arith.constant 0 : i32
    %c0_i32_0 = arith.constant 0 : i32
    %c0_i32_1 = arith.constant 0 : i32
    return %arg0, %c0_i32, %c0_i32_0 : i32, i32, i32
  }
  func.func @transform_1(%arg0: i32) -> (i32, i32, i32) {
    %c0_i32 = arith.constant 0 : i32
    %c0_i32_0 = arith.constant 0 : i32
    %c0_i32_1 = arith.constant 0 : i32
    return %arg0, %c0_i32, %c0_i32_0 : i32, i32, i32
  }
  func.func @transform_2(%arg0: i32) -> (i32, i32, i32) {
    %c0_i32 = arith.constant 0 : i32
    %c0_i32_0 = arith.constant 0 : i32
    %c0_i32_1 = arith.constant 0 : i32
    return %arg0, %c0_i32, %c0_i32_0 : i32, i32, i32
  }
  func.func @transform_3(%arg0: i32) -> (i32, i32, i32) {
    %c0_i32 = arith.constant 0 : i32
    %c0_i32_0 = arith.constant 0 : i32
    %c0_i32_1 = arith.constant 0 : i32
    return %arg0, %c0_i32, %c0_i32_0 : i32, i32, i32
  }
  func.func @transform_4(%arg0: i32) -> (i32, i32, i32) {
    %c0_i32 = arith.constant 0 : i32
    %c0_i32_0 = arith.constant 0 : i32
    %c0_i32_1 = arith.constant 0 : i32
    return %arg0, %c0_i32, %c0_i32_0 : i32, i32, i32
  }
}

</mosaic_0001>

<llo_original>
// kernel: tpu_custom_call.1
$region0: #{tpu_custom_call.1}
  #allocation0 [shape = 'u32[]', space=smem, size = 0x4, offset = 0x4, fixed_abs, tag = 'smem constant byte address 0x4 - core index']
  #allocation1 [shape = 'u32[144,128]{1,0:T(1,128)}', space=vmem, size = 0x12000, scoped, tag = 'internal scratch']
  %s0 = inlined_call_operand.hbm [shape: f32[2,4,8], index: 0, kind: input, shape index: {}]
  %s1 = inlined_call_operand.hbm [shape: f32[2,4,8], index: 1, kind: input, shape index: {}]
  %s2 = inlined_call_operand.vmem [shape: f32[2,1,8], index: 2, kind: input, shape index: {}]
  %s3 = inlined_call_operand.hbm [shape: f32[1,1,4], index: 3, kind: output, shape index: {0}]
  %s4 = inlined_call_operand.hbm [shape: f32[1,1,1], index: 4, kind: output, shape index: {1}]
  %5 = xla_tuple %s3, %s4
  %s6 = sld [smem:[#allocation0]]
  $region38: #{tpu_custom_call.1} parent=0
    _
  %s8 = ssub.s32 1, %s6
  %s9 = scalar_select 0, %s8, %s6
  $region1: #{tpu_custom_call.1} parent=0
    #allocation2 [shape = 'u8[4096]{0}', space=vmem, size = 0x1000, scoped, tag = 'input window, operand 0, single buffered']
    #allocation3 [shape = 's32[1]{0}', space=sflag, size = 0x4, scoped, tag = 'scoped memory for tpu_custom_call.1']
    #allocation4 [shape = 's32[1]{0}', space=sflag, size = 0x4, scoped, tag = 'scoped memory for tpu_custom_call.1']
    #allocation5 [shape = 'u8[4096]{0}', space=vmem, size = 0x1000, scoped, tag = 'input window, operand 1, single buffered']
    #allocation6 [shape = 's32[1]{0}', space=sflag, size = 0x4, scoped, tag = 'scoped memory for tpu_custom_call.1']
    #allocation7 [shape = 'u8[512]{0}', space=vmem, size = 0x400, scoped, tag = 'output window, operand 0, single buffered']
    #allocation8 [shape = 'u8[512]{0}', space=vmem, size = 0x400, scoped, tag = 'output window, operand 1, single buffered']
    #allocation9 [shape = 's32[1]{0}', space=sflag, size = 0x4, scoped, tag = 'scoped memory for tpu_custom_call.1']
    %10 = vsyncpa [#allocation3], 0
    %11 = vsyncpa [#allocation6], 0
    %12 = vsyncpa [#allocation4], 0
    %13 = vsyncpa [#allocation9], 0
    // Predicated region
    $region2: #{tpu_custom_call.1} parent=1 // pred_check
      _
    $region3: #{tpu_custom_call.1} parent=1 // pred_check_branch
      %15 = sbr.rel (0) target = $region5
    $region4: #{tpu_custom_call.1} parent=1 // pred_region
      %s17 = ssub.s32 128, 128
      %18 = vsyncadd [#allocation3], %s17
      %s19 = sshll.u32 [#allocation2], 4
      %s20 = int_to_ptr.vmem [resolvable:$true] %s19
      %25 = dma.hbm_to_vmem [thread:$0]  %s0, 128, %s20, [#allocation3], 64, 64, 4
    $region5: #{tpu_custom_call.1} parent=1 // pred_fallthru
      _
    // Predicated region
    $region6: #{tpu_custom_call.1} parent=1 // pred_check
      _
    $region7: #{tpu_custom_call.1} parent=1 // pred_check_branch
      %27 = sbr.rel (0) target = $region9
    $region8: #{tpu_custom_call.1} parent=1 // pred_region
      %s29 = ssub.s32 128, 128
      %30 = vsyncadd [#allocation6], %s29
      %s31 = sshll.u32 [#allocation5], 4
      %s32 = int_to_ptr.vmem [resolvable:$true] %s31
      %37 = dma.hbm_to_vmem [thread:$0]  %s1, 128, %s32, [#allocation6], 64, 64, 4
    $region9: #{tpu_custom_call.1} parent=1 // pred_fallthru
      _
    // Predicated region
    $region10: #{tpu_custom_call.1} parent=1 // pred_check
      _
    $region11: #{tpu_custom_call.1} parent=1 // pred_check_branch
      %39 = sbr.rel (0) target = $region13
    $region12: #{tpu_custom_call.1} parent=1 // pred_region
      _
    $region13: #{tpu_custom_call.1} parent=1 // pred_fallthru
      _
    // Predicated region
    $region14: #{tpu_custom_call.1} parent=1 // pred_check
      _
    $region15: #{tpu_custom_call.1} parent=1 // pred_check_branch
      %41 = sbr.rel (0) target = $region17
    $region16: #{tpu_custom_call.1} parent=1 // pred_region
      %42 = dma.done [#allocation3], 128
    $region17: #{tpu_custom_call.1} parent=1 // pred_fallthru
      _
    // Predicated region
    $region18: #{tpu_custom_call.1} parent=1 // pred_check
      _
    $region19: #{tpu_custom_call.1} parent=1 // pred_check_branch
      %44 = sbr.rel (0) target = $region21
    $region20: #{tpu_custom_call.1} parent=1 // pred_region
      %45 = dma.done [#allocation6], 128
    $region21: #{tpu_custom_call.1} parent=1 // pred_fallthru
      _
    %v46 = vld [vmem:[#allocation2] sm:$0xf]
    %v47 = vld [vmem:[#allocation2 + $0x4] sm:$0xf]
    %v48 = vld [vmem:[#allocation5] sm:$0xf]
    %v49 = vld [vmem:[#allocation5 + $0x4] sm:$0xf]
    %v50 = vld [vmem:[%s2] sm:$0x1]
    %v51 = vld [vmem:[%s2 + $0x1] sm:$0x1]
    %v54 = vlaneseq
    %v55 = vshrl.u32 %v54, 7
    %v56 = vsub.s32 0, %v55
    %v57 = vrot.slane %v50, %v56
    %v58 = vlaneseq
    %v59 = vshrl.u32 %v58, 7
    %v60 = vsub.s32 0, %v59
    %v61 = vrot.slane %v51, %v60
    %v64 = vmul.f32 %v46, %v57
    %v65 = vmul.f32 %v47, %v61
    %v66 = vmul.f32 %v48, %v57
    %v67 = vmul.f32 %v49, %v61
    %v68 = vsub.f32 %v64, %v66
    %v69 = vsub.f32 %v65, %v67
    %v70 = vand.u32 2147483647, %v68
    %v71 = vand.u32 2147483647, %v69
    %vm72 = vcmask 60416
    %v73 = vsel %vm72, %v70, 0.0
    %v74 = vsel %vm72, %v71, 0.0
    %v75 = vadd.f32 %v73, %v74
    %v76 = vsel %vm72, %v75, 0.0
    %77 = vadd.xlane.f32.xlu0 %v76
    %v78 = vpop.xlane.xlu0 %77
    %v80 = vlaneseq
    %v81 = vand.u32 %v80, 127
    %v82 = vlaneseq
    %v83 = vshrl.u32 %v82, 7
    %v84 = vsub.s32 %v81, %v83
    %v85 = vrot.slane %v78, %v84
    %vm87 = vcmask 24576
    %88 = vst.msk [vmem:[#allocation7] sm:$0x1] %vm87, %v85
    %vm89 = vcmask 57344
    %v90 = vsel %vm89, %v50, 0.0
    %v91 = vsel %vm89, %v51, 0.0
    %v92 = vadd.f32 %v90, %v91
    %93 = vadd.xlane.f32.xlu0 %v92
    %v94 = vpop.xlane.xlu0 %93
    %v95 = vrot.slane %v94, 4
    %v96 = vadd.f32 %v94, %v95
    %v97 = vrot.slane %v96, 2
    %v98 = vadd.f32 %v96, %v97
    %v99 = vrot.slane %v98, 1
    %v100 = vadd.f32 %v98, %v99
    %s101 = vtos %v100
    %v102 = vstv %s101
    %vm103 = vcmask 0
    %104 = vst.msk [vmem:[#allocation8] sm:$0x1] %vm103, %v102
    // Predicated region
    $region22: #{tpu_custom_call.1} parent=1 // pred_check
      _
    $region23: #{tpu_custom_call.1} parent=1 // pred_check_branch
      %106 = sbr.rel (0) target = $region25
    $region24: #{tpu_custom_call.1} parent=1 // pred_region
      %s108 = ssub.s32 16, 16
      %109 = vsyncadd [#allocation4], %s108
      %s111 = sshll.u32 [#allocation7], 4
      %s112 = int_to_ptr.vmem [resolvable:$true] %s111
      %114 = dma.vmem_to_hbm [thread:$0]  %s112, 16, %s3, [#allocation4]
    $region25: #{tpu_custom_call.1} parent=1 // pred_fallthru
      _
    // Predicated region
    $region26: #{tpu_custom_call.1} parent=1 // pred_check
      _
    $region27: #{tpu_custom_call.1} parent=1 // pred_check_branch
      %116 = sbr.rel (0) target = $region29
    $region28: #{tpu_custom_call.1} parent=1 // pred_region
      %s118 = ssub.s32 16, 16
      %119 = vsyncadd [#allocation9], %s118
      %s121 = sshll.u32 [#allocation8], 4
      %s122 = int_to_ptr.vmem [resolvable:$true] %s121
      %124 = dma.vmem_to_hbm [thread:$0]  %s122, 16, %s4, [#allocation9]
    $region29: #{tpu_custom_call.1} parent=1 // pred_fallthru
      _
    // Predicated region
    $region30: #{tpu_custom_call.1} parent=1 // pred_check
      _
    $region31: #{tpu_custom_call.1} parent=1 // pred_check_branch
      %126 = sbr.rel (0) target = $region33
    $region32: #{tpu_custom_call.1} parent=1 // pred_region
      %127 = dma.done [#allocation4], 16
    $region33: #{tpu_custom_call.1} parent=1 // pred_fallthru
      _
    // Predicated region
    $region34: #{tpu_custom_call.1} parent=1 // pred_check
      _
    $region35: #{tpu_custom_call.1} parent=1 // pred_check_branch
      %129 = sbr.rel (0) target = $region37
    $region36: #{tpu_custom_call.1} parent=1 // pred_region
      %130 = dma.done [#allocation9], 16
    $region37: #{tpu_custom_call.1} parent=1 // pred_fallthru
      _
    %131 = vsyncpa [#allocation3], 1
    %132 = vsyncpa [#allocation6], 1
    %133 = vsyncpa [#allocation4], 1
    %134 = vsyncpa [#allocation9], 1

</llo_original>
